<compile_context>
chip_gen: v7x
topology: tpu7x:2x2x1
jax: 0.10.0
libtpu: 0.0.40
codegen_flags: <defaults>
</compile_context>

<pallas_src>
import functools
import math

import jax
import jax.numpy as jnp
from jax.experimental import pallas as pl
from jax.experimental.pallas import tpu as pltpu


# ------------------------------ fused kernel -------------------------------


def sms_fused_kernel(
    inp_ref,        # (N, E)    rows agent-major: r = agent * b + batch
    obs_ref,        # (N, OV)
    h0_ref,         # (N, H)
    fc1_wT_ref,     # (E, H)
    fc1_b_ref,      # (1, H)
    gru_wih_T_ref,  # (H, 3H)
    gru_whh_T_ref,  # (H, 3H)
    gru_bih_ref,    # (1, 3H)
    gru_bhh_ref,    # (1, 3H)
    me1o_w_ref,     # (OV, MH)  msg_encoder L1, obs columns
    me1i_w_ref,     # (A, MH)   msg_encoder L1, agent one-hot columns
    me1_b_ref,      # (1, MH)
    me2_w_ref,      # (MH, A*MD)
    me2_b_ref,      # (1, A*MD)
    polh_w_ref,     # (H, NA)   policy, h columns
    polm_w_ref,     # (A*MD, NA) policy, msg_rec columns
    pol_b_ref,      # (1, NA)
    logits_ref,     # out (N, NA)
    h_ref,          # out (N, H)
    msgrec_scr,     # scratch (N, A*MD)
    *, b, a, H, md,
):
    N = a * b

    # ---------------- fc1 + ReLU ---------------------------------------------
    x = jnp.dot(inp_ref[...], fc1_wT_ref[...],
                preferred_element_type=jnp.float32) + fc1_b_ref[...]
    x = jnp.maximum(x, 0.0)
    h0 = h0_ref[...]

    # ---------------- GRUCell: two dense dots, register-resident gates -------
    gi = jnp.dot(x, gru_wih_T_ref[...],
                 preferred_element_type=jnp.float32) + gru_bih_ref[...]
    gh = jnp.dot(h0, gru_whh_T_ref[...],
                 preferred_element_type=jnp.float32) + gru_bhh_ref[...]

    # torch.nn.GRUCell gate order: (r, z, n)
    r = jax.nn.sigmoid(gi[:, 0:H] + gh[:, 0:H])
    z = jax.nn.sigmoid(gi[:, H:2 * H] + gh[:, H:2 * H])
    n = jnp.tanh(gi[:, 2 * H:3 * H] + r * gh[:, 2 * H:3 * H])
    h = (1.0 - z) * n + z * h0
    h_ref[...] = h

    # ---------------- msg_encoder (agent one-hot baked in) ------------------
    # one-hot[r, c] = 1 iff row r belongs to agent c (rows are agent-major).
    row = jax.lax.broadcasted_iota(jnp.int32, (N, a), 0)
    col = jax.lax.broadcasted_iota(jnp.int32, (N, a), 1)
    onehot = ((row >= col * b) & (row < (col + 1) * b)).astype(jnp.float32)

    hid = jnp.dot(obs_ref[...], me1o_w_ref[...],
                  preferred_element_type=jnp.float32)
    hid = hid + jnp.dot(onehot, me1i_w_ref[...],
                        preferred_element_type=jnp.float32)
    hid = jnp.maximum(hid + me1_b_ref[...], 0.0)
    msg = jnp.dot(hid, me2_w_ref[...],
                  preferred_element_type=jnp.float32) + me2_b_ref[...]
    # msg[sender*b + batch, receiver*md + d]

    # -------- sender<->receiver transpose + self-loop mask, in VMEM ---------
    # msg_rec[receiver*b + batch, sender*md + d] = msg[sender*b + batch,
    #                                                  receiver*md + d]
    # with the diagonal (sender == receiver) zeroed (the "ones - eye" mask).
    msgrec_scr[...] = jnp.zeros(msgrec_scr.shape, jnp.float32)
    for ri in range(a):
        for si in range(a):
            if si == ri:
                continue
            msgrec_scr[ri * b:(ri + 1) * b, si * md:(si + 1) * md] = (
                msg[si * b:(si + 1) * b, ri * md:(ri + 1) * md])

    # ---------------- policy head (split weight, no concat) -----------------
    logits = jnp.dot(h, polh_w_ref[...], preferred_element_type=jnp.float32)
    logits = logits + jnp.dot(msgrec_scr[...], polm_w_ref[...],
                              preferred_element_type=jnp.float32)
    logits_ref[...] = logits + pol_b_ref[...]


# ------------------------------ parameter setup -----------------------------


def linear_init(key, in_dim, out_dim):
    """torch.nn.Linear-style uniform(-1/sqrt(fan_in), 1/sqrt(fan_in)) init."""
    k1, k2 = jax.random.split(key)
    bound = 1.0 / math.sqrt(in_dim)
    w = jax.random.uniform(k1, (out_dim, in_dim), jnp.float32, -bound, bound)
    b = jax.random.uniform(k2, (out_dim,), jnp.float32, -bound, bound)
    return w, b


def make_params(key, input_shape, obs_vshape, cfg):
    H = cfg["rnn_hidden_dim"]
    A = cfg["n_agents"]
    md = cfg["msg_dim"]
    MH = cfg["msg_hidden_dim"]
    NA = cfg["n_actions"]
    ks = jax.random.split(key, 6)
    p = {}

    # fc1
    w, bb = linear_init(ks[0], input_shape, H)
    p["fc1_wT"], p["fc1_b"] = w.T, bb[None, :]

    # GRUCell (torch layout: weight_ih (3H, H), weight_hh (3H, H), biases (3H,))
    bound = 1.0 / math.sqrt(H)
    kg = jax.random.split(ks[1], 4)
    p["gru_wih_T"] = jax.random.uniform(
        kg[0], (3 * H, H), jnp.float32, -bound, bound).T      # (H, 3H)
    p["gru_whh_T"] = jax.random.uniform(
        kg[1], (3 * H, H), jnp.float32, -bound, bound).T      # (H, 3H)
    p["gru_bih"] = jax.random.uniform(
        kg[2], (3 * H,), jnp.float32, -bound, bound)[None, :]
    p["gru_bhh"] = jax.random.uniform(
        kg[3], (3 * H,), jnp.float32, -bound, bound)[None, :]

    # policy (use_rnn=True): Linear(H + A*md, NA) split into h / msg parts
    w, bb = linear_init(ks[2], H + A * md, NA)
    wT = w.T                                    # (H + A*md, NA)
    p["pol_h_wT"], p["pol_m_wT"], p["pol_b"] = wT[:H], wT[H:], bb[None, :]

    # msg_encoder L1: Linear(OV + A, MH) split into obs / agent-id parts
    w, bb = linear_init(ks[3], obs_vshape + A, MH)
    wT = w.T                                    # (OV + A, MH)
    p["me1_obs_wT"], p["me1_id_wT"], p["me1_b"] = (
        wT[:obs_vshape], wT[obs_vshape:], bb[None, :])

    # msg_encoder L2
    w, bb = linear_init(ks[4], MH, md * A)
    p["me2_wT"], p["me2_b"] = w.T, bb[None, :]
    # TODO(synk): selector MLP params not needed on this (default-flag) path.
    return p


# ------------------------------ forward (Pallas) ----------------------------


def sms_agent_forward(params, inputs, obs_t, hidden_state, cfg):
    """inputs: (b, a, e); obs_t: (b, a, obs_vshape); hidden_state: (b, a, H)."""
    b, a, e = inputs.shape
    H = cfg["rnn_hidden_dim"]
    md = cfg["msg_dim"]
    na = cfg["n_actions"]
    N = a * b

    # agent-major row layout: row = agent * b + batch
    inp2 = inputs.transpose(1, 0, 2).reshape(N, e)
    obs2 = obs_t.transpose(1, 0, 2).reshape(N, -1)
    h02 = hidden_state.transpose(1, 0, 2).reshape(N, H)

    kernel = functools.partial(sms_fused_kernel, b=b, a=a, H=H, md=md)
    vmem = pl.BlockSpec(memory_space=pltpu.MemorySpace.VMEM)

    args = (inp2, obs2, h02,
            params["fc1_wT"], params["fc1_b"],
            params["gru_wih_T"], params["gru_whh_T"],
            params["gru_bih"], params["gru_bhh"],
            params["me1_obs_wT"], params["me1_id_wT"], params["me1_b"],
            params["me2_wT"], params["me2_b"],
            params["pol_h_wT"], params["pol_m_wT"], params["pol_b"])

    logits, h = pl.pallas_call(
        kernel,
        out_shape=(jax.ShapeDtypeStruct((N, na), jnp.float32),
                   jax.ShapeDtypeStruct((N, H), jnp.float32)),
        in_specs=[vmem] * len(args),
        out_specs=(pl.BlockSpec(memory_space=pltpu.MemorySpace.VMEM),
                   pl.BlockSpec(memory_space=pltpu.MemorySpace.VMEM)),
        scratch_shapes=[pltpu.VMEM((N, a * md), jnp.float32)],
    )(*args)

    logits = logits.reshape(a, b, na).transpose(1, 0, 2)
    h = h.reshape(a, b, H).transpose(1, 0, 2)

    # msg_counter (returned mask) is a constant: ones - eye (default-flag path)
    msg_counter = jnp.ones((b, a, a), jnp.float32) - jnp.eye(a, dtype=jnp.float32)[None]
    return logits, h, msg_counter


# ------------------------------ pure-JAX reference --------------------------


def sms_agent_reference(params, inputs, obs_t, hidden_state, cfg):
    b, a, e = inputs.shape
    H = cfg["rnn_hidden_dim"]
    md = cfg["msg_dim"]

    inp2 = inputs.reshape(b * a, e)
    h0 = hidden_state.reshape(b * a, H)

    x = jnp.maximum(inp2 @ params["fc1_wT"] + params["fc1_b"], 0.0)
    gi = x @ params["gru_wih_T"] + params["gru_bih"]
    gh = h0 @ params["gru_whh_T"] + params["gru_bhh"]
    r = jax.nn.sigmoid(gi[:, :H] + gh[:, :H])
    z = jax.nn.sigmoid(gi[:, H:2 * H] + gh[:, H:2 * H])
    n = jnp.tanh(gi[:, 2 * H:] + r * gh[:, 2 * H:])
    h = (1.0 - z) * n + z * h0

    eye = jnp.eye(a, dtype=jnp.float32)
    obs_id = jnp.concatenate(
        [obs_t, jnp.broadcast_to(eye[None], (b, a, a))], axis=-1).reshape(b * a, -1)
    me1_wT = jnp.concatenate([params["me1_obs_wT"], params["me1_id_wT"]], axis=0)
    hid = jnp.maximum(obs_id @ me1_wT + params["me1_b"], 0.0)
    msg = hid @ params["me2_wT"] + params["me2_b"]
    msg_mat = msg.reshape(b, a, a, md).transpose(0, 2, 1, 3)
    mask = jnp.ones((b, a, a), jnp.float32) - eye[None]
    msg_rec = (msg_mat * mask[..., None]).reshape(b, a, a * md)

    pol_wT = jnp.concatenate([params["pol_h_wT"], params["pol_m_wT"]], axis=0)
    pol_in = jnp.concatenate([h, msg_rec.reshape(b * a, -1)], axis=-1)
    logits = pol_in @ pol_wT + params["pol_b"]
    return logits.reshape(b, a, -1), h.reshape(b, a, -1), mask


# ----------------------------------- main ------------------------------------

if __name__ == "__main__":
    cfg = dict(
        rnn_hidden_dim=32,
        n_agents=3,
        msg_dim=4,
        msg_hidden_dim=32,
        n_actions=5,
    )
    b = 2
    a = cfg["n_agents"]
    obs_vshape = 10
    input_shape = 16  # per-agent feature dim e

    key = jax.random.PRNGKey(0)
    kp, ki, ko, kh = jax.random.split(key, 4)

    params = make_params(kp, input_shape, obs_vshape, cfg)
    inputs = jax.random.normal(ki, (b, a, input_shape), jnp.float32)
    obs_t = jax.random.normal(ko, (b, a, obs_vshape), jnp.float32)   # batch['obs'][:, t_ep]
    hidden = jnp.zeros((b, a, cfg["rnn_hidden_dim"]), jnp.float32)   # init_hidden()

    fwd = jax.jit(functools.partial(sms_agent_forward, cfg=cfg))
    logits, h, msg_counter = jax.block_until_ready(
        fwd(params, inputs, obs_t, hidden))

    ref_logits, ref_h, ref_mask = sms_agent_reference(params, inputs, obs_t, hidden, cfg)

    assert logits.shape == (b, a, cfg["n_actions"])
    assert h.shape == (b, a, cfg["rnn_hidden_dim"])
    assert msg_counter.shape == (b, a, a)
    assert jnp.allclose(logits, ref_logits, atol=1e-4, rtol=1e-4)
    assert jnp.allclose(h, ref_h, atol=1e-4, rtol=1e-4)
    assert jnp.allclose(msg_counter, ref_mask)

    print("KERNEL_OK")
</pallas_src>

<mosaic_0001>
module attributes {stable_mosaic.version = 11 : i64} {
  func.func @sms_fused_kernel(%arg0: memref<6x16xf32, #tpu.memory_space<vmem>>, %arg1: memref<6x10xf32, #tpu.memory_space<vmem>>, %arg2: memref<6x32xf32, #tpu.memory_space<vmem>>, %arg3: memref<16x32xf32, #tpu.memory_space<vmem>>, %arg4: memref<1x32xf32, #tpu.memory_space<vmem>>, %arg5: memref<32x96xf32, #tpu.memory_space<vmem>>, %arg6: memref<32x96xf32, #tpu.memory_space<vmem>>, %arg7: memref<1x96xf32, #tpu.memory_space<vmem>>, %arg8: memref<1x96xf32, #tpu.memory_space<vmem>>, %arg9: memref<10x32xf32, #tpu.memory_space<vmem>>, %arg10: memref<3x32xf32, #tpu.memory_space<vmem>>, %arg11: memref<1x32xf32, #tpu.memory_space<vmem>>, %arg12: memref<32x12xf32, #tpu.memory_space<vmem>>, %arg13: memref<1x12xf32, #tpu.memory_space<vmem>>, %arg14: memref<32x5xf32, #tpu.memory_space<vmem>>, %arg15: memref<12x5xf32, #tpu.memory_space<vmem>>, %arg16: memref<1x5xf32, #tpu.memory_space<vmem>>, %arg17: memref<6x5xf32, #tpu.memory_space<vmem>>, %arg18: memref<6x32xf32, #tpu.memory_space<vmem>>, %arg19: memref<6x12xf32, #tpu.memory_space<vmem>>) attributes {dimension_semantics = [], scalar_prefetch = 0 : i64, scratch_operands = 1 : i64, tpu.core_type = #tpu.core_type<tc>} {
    %c0 = arith.constant 0 : index
    %c0_0 = arith.constant 0 : index
    %0 = vector.load %arg0[%c0, %c0_0] : memref<6x16xf32, #tpu.memory_space<vmem>>, vector<6x16xf32>
    %c0_1 = arith.constant 0 : index
    %c0_2 = arith.constant 0 : index
    %1 = vector.load %arg3[%c0_1, %c0_2] : memref<16x32xf32, #tpu.memory_space<vmem>>, vector<16x32xf32>
    %cst = arith.constant dense<0.000000e+00> : vector<6x32xf32>
    %2 = tpu.matmul %0, %1, %cst {dimension_numbers = #tpu.dot_dimension_numbers<[1], [0], [0], [1], [0, 0, 1, 1], [], []>} : vector<6x16xf32>, vector<16x32xf32>, vector<6x32xf32> -> vector<6x32xf32>
    %c0_3 = arith.constant 0 : index
    %c0_4 = arith.constant 0 : index
    %3 = vector.load %arg4[%c0_3, %c0_4] : memref<1x32xf32, #tpu.memory_space<vmem>>, vector<1x32xf32>
    %4 = vector.broadcast %3 : vector<1x32xf32> to vector<6x32xf32>
    %5 = arith.addf %2, %4 : vector<6x32xf32>
    %cst_5 = arith.constant 0.000000e+00 : f32
    %6 = vector.broadcast %cst_5 : f32 to vector<6x32xf32>
    %7 = arith.maximumf %5, %6 : vector<6x32xf32>
    %c0_6 = arith.constant 0 : index
    %c0_7 = arith.constant 0 : index
    %8 = vector.load %arg2[%c0_6, %c0_7] : memref<6x32xf32, #tpu.memory_space<vmem>>, vector<6x32xf32>
    %c0_8 = arith.constant 0 : index
    %c0_9 = arith.constant 0 : index
    %9 = vector.load %arg5[%c0_8, %c0_9] : memref<32x96xf32, #tpu.memory_space<vmem>>, vector<32x96xf32>
    %cst_10 = arith.constant dense<0.000000e+00> : vector<6x96xf32>
    %10 = tpu.matmul %7, %9, %cst_10 {dimension_numbers = #tpu.dot_dimension_numbers<[1], [0], [0], [1], [0, 0, 1, 1], [], []>} : vector<6x32xf32>, vector<32x96xf32>, vector<6x96xf32> -> vector<6x96xf32>
    %c0_11 = arith.constant 0 : index
    %c0_12 = arith.constant 0 : index
    %11 = vector.load %arg7[%c0_11, %c0_12] : memref<1x96xf32, #tpu.memory_space<vmem>>, vector<1x96xf32>
    %12 = vector.broadcast %11 : vector<1x96xf32> to vector<6x96xf32>
    %13 = arith.addf %10, %12 : vector<6x96xf32>
    %c0_13 = arith.constant 0 : index
    %c0_14 = arith.constant 0 : index
    %14 = vector.load %arg6[%c0_13, %c0_14] : memref<32x96xf32, #tpu.memory_space<vmem>>, vector<32x96xf32>
    %cst_15 = arith.constant dense<0.000000e+00> : vector<6x96xf32>
    %15 = tpu.matmul %8, %14, %cst_15 {dimension_numbers = #tpu.dot_dimension_numbers<[1], [0], [0], [1], [0, 0, 1, 1], [], []>} : vector<6x32xf32>, vector<32x96xf32>, vector<6x96xf32> -> vector<6x96xf32>
    %c0_16 = arith.constant 0 : index
    %c0_17 = arith.constant 0 : index
    %16 = vector.load %arg8[%c0_16, %c0_17] : memref<1x96xf32, #tpu.memory_space<vmem>>, vector<1x96xf32>
    %17 = vector.broadcast %16 : vector<1x96xf32> to vector<6x96xf32>
    %18 = arith.addf %15, %17 : vector<6x96xf32>
    %19 = vector.extract_strided_slice %13 {offsets = [0, 0], sizes = [6, 32], strides = [1, 1]} : vector<6x96xf32> to vector<6x32xf32>
    %20 = vector.extract_strided_slice %18 {offsets = [0, 0], sizes = [6, 32], strides = [1, 1]} : vector<6x96xf32> to vector<6x32xf32>
    %21 = arith.addf %19, %20 : vector<6x32xf32>
    %22 = arith.negf %21 : vector<6x32xf32>
    %23 = math.exp %22 : vector<6x32xf32>
    %cst_18 = arith.constant 1.000000e+00 : f32
    %24 = vector.broadcast %cst_18 : f32 to vector<6x32xf32>
    %25 = arith.addf %24, %23 : vector<6x32xf32>
    %26 = arith.divf %24, %25 : vector<6x32xf32>
    %27 = vector.extract_strided_slice %13 {offsets = [0, 32], sizes = [6, 32], strides = [1, 1]} : vector<6x96xf32> to vector<6x32xf32>
    %28 = vector.extract_strided_slice %18 {offsets = [0, 32], sizes = [6, 32], strides = [1, 1]} : vector<6x96xf32> to vector<6x32xf32>
    %29 = arith.addf %27, %28 : vector<6x32xf32>
    %30 = arith.negf %29 : vector<6x32xf32>
    %31 = math.exp %30 : vector<6x32xf32>
    %cst_19 = arith.constant 1.000000e+00 : f32
    %32 = vector.broadcast %cst_19 : f32 to vector<6x32xf32>
    %33 = arith.addf %32, %31 : vector<6x32xf32>
    %34 = arith.divf %32, %33 : vector<6x32xf32>
    %35 = vector.extract_strided_slice %13 {offsets = [0, 64], sizes = [6, 32], strides = [1, 1]} : vector<6x96xf32> to vector<6x32xf32>
    %36 = vector.extract_strided_slice %18 {offsets = [0, 64], sizes = [6, 32], strides = [1, 1]} : vector<6x96xf32> to vector<6x32xf32>
    %37 = arith.mulf %26, %36 : vector<6x32xf32>
    %38 = arith.addf %35, %37 : vector<6x32xf32>
    %39 = math.tanh %38 : vector<6x32xf32>
    %cst_20 = arith.constant 1.000000e+00 : f32
    %40 = vector.broadcast %cst_20 : f32 to vector<6x32xf32>
    %41 = arith.subf %40, %34 : vector<6x32xf32>
    %42 = arith.mulf %41, %39 : vector<6x32xf32>
    %43 = arith.mulf %34, %8 : vector<6x32xf32>
    %44 = arith.addf %42, %43 : vector<6x32xf32>
    %c0_21 = arith.constant 0 : index
    %c0_22 = arith.constant 0 : index
    %45 = vector.load %arg18[%c0_21, %c0_22] : memref<6x32xf32, #tpu.memory_space<vmem>>, vector<6x32xf32>
    tpu.vector_store %arg18[%c0_21, %c0_22], %44 {strides = array<i32>} : memref<6x32xf32, #tpu.memory_space<vmem>>, vector<6x32xf32>,
    %46 = tpu.iota {dimensions = array<i32: 0>} : vector<6x3xi32>
    %47 = tpu.iota {dimensions = array<i32: 1>} : vector<6x3xi32>
    %c2_i32 = arith.constant 2 : i32
    %48 = vector.broadcast %c2_i32 : i32 to vector<6x3xi32>
    %49 = arith.muli %47, %48 : vector<6x3xi32>
    %50 = arith.cmpi sge, %46, %49 : vector<6x3xi32>
    %c1_i32 = arith.constant 1 : i32
    %51 = vector.broadcast %c1_i32 : i32 to vector<6x3xi32>
    %52 = arith.addi %47, %51 : vector<6x3xi32>
    %c2_i32_23 = arith.constant 2 : i32
    %53 = vector.broadcast %c2_i32_23 : i32 to vector<6x3xi32>
    %54 = arith.muli %52, %53 : vector<6x3xi32>
    %55 = arith.cmpi slt, %46, %54 : vector<6x3xi32>
    %56 = arith.andi %50, %55 : vector<6x3xi1>
    %57 = arith.extui %56 : vector<6x3xi1> to vector<6x3xi32>
    %58 = arith.sitofp %57 : vector<6x3xi32> to vector<6x3xf32>
    %c0_24 = arith.constant 0 : index
    %c0_25 = arith.constant 0 : index
    %59 = vector.load %arg1[%c0_24, %c0_25] : memref<6x10xf32, #tpu.memory_space<vmem>>, vector<6x10xf32>
    %c0_26 = arith.constant 0 : index
    %c0_27 = arith.constant 0 : index
    %60 = vector.load %arg9[%c0_26, %c0_27] : memref<10x32xf32, #tpu.memory_space<vmem>>, vector<10x32xf32>
    %cst_28 = arith.constant dense<0.000000e+00> : vector<6x32xf32>
    %61 = tpu.matmul %59, %60, %cst_28 {dimension_numbers = #tpu.dot_dimension_numbers<[1], [0], [0], [1], [0, 0, 1, 1], [], []>} : vector<6x10xf32>, vector<10x32xf32>, vector<6x32xf32> -> vector<6x32xf32>
    %c0_29 = arith.constant 0 : index
    %c0_30 = arith.constant 0 : index
    %62 = vector.load %arg10[%c0_29, %c0_30] : memref<3x32xf32, #tpu.memory_space<vmem>>, vector<3x32xf32>
    %cst_31 = arith.constant dense<0.000000e+00> : vector<6x32xf32>
    %63 = tpu.matmul %58, %62, %cst_31 {dimension_numbers = #tpu.dot_dimension_numbers<[1], [0], [0], [1], [0, 0, 1, 1], [], []>} : vector<6x3xf32>, vector<3x32xf32>, vector<6x32xf32> -> vector<6x32xf32>
    %64 = arith.addf %61, %63 : vector<6x32xf32>
    %c0_32 = arith.constant 0 : index
    %c0_33 = arith.constant 0 : index
    %65 = vector.load %arg11[%c0_32, %c0_33] : memref<1x32xf32, #tpu.memory_space<vmem>>, vector<1x32xf32>
    %66 = vector.broadcast %65 : vector<1x32xf32> to vector<6x32xf32>
    %67 = arith.addf %64, %66 : vector<6x32xf32>
    %cst_34 = arith.constant 0.000000e+00 : f32
    %68 = vector.broadcast %cst_34 : f32 to vector<6x32xf32>
    %69 = arith.maximumf %67, %68 : vector<6x32xf32>
    %c0_35 = arith.constant 0 : index
    %c0_36 = arith.constant 0 : index
    %70 = vector.load %arg12[%c0_35, %c0_36] : memref<32x12xf32, #tpu.memory_space<vmem>>, vector<32x12xf32>
    %cst_37 = arith.constant dense<0.000000e+00> : vector<6x12xf32>
    %71 = tpu.matmul %69, %70, %cst_37 {dimension_numbers = #tpu.dot_dimension_numbers<[1], [0], [0], [1], [0, 0, 1, 1], [], []>} : vector<6x32xf32>, vector<32x12xf32>, vector<6x12xf32> -> vector<6x12xf32>
    %c0_38 = arith.constant 0 : index
    %c0_39 = arith.constant 0 : index
    %72 = vector.load %arg13[%c0_38, %c0_39] : memref<1x12xf32, #tpu.memory_space<vmem>>, vector<1x12xf32>
    %73 = vector.broadcast %72 : vector<1x12xf32> to vector<6x12xf32>
    %74 = arith.addf %71, %73 : vector<6x12xf32>
    %cst_40 = arith.constant 0.000000e+00 : f32
    %75 = vector.broadcast %cst_40 : f32 to vector<6x12xf32>
    %c0_41 = arith.constant 0 : index
    %c0_42 = arith.constant 0 : index
    %76 = vector.load %arg19[%c0_41, %c0_42] : memref<6x12xf32, #tpu.memory_space<vmem>>, vector<6x12xf32>
    tpu.vector_store %arg19[%c0_41, %c0_42], %75 {strides = array<i32>} : memref<6x12xf32, #tpu.memory_space<vmem>>, vector<6x12xf32>,
    %77 = vector.extract_strided_slice %74 {offsets = [2, 0], sizes = [2, 4], strides = [1, 1]} : vector<6x12xf32> to vector<2x4xf32>
    %c0_43 = arith.constant 0 : index
    %c4 = arith.constant 4 : index
    %78 = vector.load %arg19[%c0_43, %c4] : memref<6x12xf32, #tpu.memory_space<vmem>>, vector<2x4xf32>
    tpu.vector_store %arg19[%c0_43, %c4], %77 {strides = array<i32>} : memref<6x12xf32, #tpu.memory_space<vmem>>, vector<2x4xf32>,
    %79 = vector.extract_strided_slice %74 {offsets = [4, 0], sizes = [2, 4], strides = [1, 1]} : vector<6x12xf32> to vector<2x4xf32>
    %c0_44 = arith.constant 0 : index
    %c8 = arith.constant 8 : index
    %80 = vector.load %arg19[%c0_44, %c8] : memref<6x12xf32, #tpu.memory_space<vmem>>, vector<2x4xf32>
    tpu.vector_store %arg19[%c0_44, %c8], %79 {strides = array<i32>} : memref<6x12xf32, #tpu.memory_space<vmem>>, vector<2x4xf32>,
    %81 = vector.extract_strided_slice %74 {offsets = [0, 4], sizes = [2, 4], strides = [1, 1]} : vector<6x12xf32> to vector<2x4xf32>
    %c2 = arith.constant 2 : index
    %c0_45 = arith.constant 0 : index
    %82 = vector.load %arg19[%c2, %c0_45] : memref<6x12xf32, #tpu.memory_space<vmem>>, vector<2x4xf32>
    tpu.vector_store %arg19[%c2, %c0_45], %81 {strides = array<i32>} : memref<6x12xf32, #tpu.memory_space<vmem>>, vector<2x4xf32>,
    %83 = vector.extract_strided_slice %74 {offsets = [4, 4], sizes = [2, 4], strides = [1, 1]} : vector<6x12xf32> to vector<2x4xf32>
    %c2_46 = arith.constant 2 : index
    %c8_47 = arith.constant 8 : index
    %84 = vector.load %arg19[%c2_46, %c8_47] : memref<6x12xf32, #tpu.memory_space<vmem>>, vector<2x4xf32>
    tpu.vector_store %arg19[%c2_46, %c8_47], %83 {strides = array<i32>} : memref<6x12xf32, #tpu.memory_space<vmem>>, vector<2x4xf32>,
    %85 = vector.extract_strided_slice %74 {offsets = [0, 8], sizes = [2, 4], strides = [1, 1]} : vector<6x12xf32> to vector<2x4xf32>
    %c4_48 = arith.constant 4 : index
    %c0_49 = arith.constant 0 : index
    %86 = vector.load %arg19[%c4_48, %c0_49] : memref<6x12xf32, #tpu.memory_space<vmem>>, vector<2x4xf32>
    tpu.vector_store %arg19[%c4_48, %c0_49], %85 {strides = array<i32>} : memref<6x12xf32, #tpu.memory_space<vmem>>, vector<2x4xf32>,
    %87 = vector.extract_strided_slice %74 {offsets = [2, 8], sizes = [2, 4], strides = [1, 1]} : vector<6x12xf32> to vector<2x4xf32>
    %c4_50 = arith.constant 4 : index
    %c4_51 = arith.constant 4 : index
    %88 = vector.load %arg19[%c4_50, %c4_51] : memref<6x12xf32, #tpu.memory_space<vmem>>, vector<2x4xf32>
    tpu.vector_store %arg19[%c4_50, %c4_51], %87 {strides = array<i32>} : memref<6x12xf32, #tpu.memory_space<vmem>>, vector<2x4xf32>,
    %c0_52 = arith.constant 0 : index
    %c0_53 = arith.constant 0 : index
    %89 = vector.load %arg14[%c0_52, %c0_53] : memref<32x5xf32, #tpu.memory_space<vmem>>, vector<32x5xf32>
    %cst_54 = arith.constant dense<0.000000e+00> : vector<6x5xf32>
    %90 = tpu.matmul %44, %89, %cst_54 {dimension_numbers = #tpu.dot_dimension_numbers<[1], [0], [0], [1], [0, 0, 1, 1], [], []>} : vector<6x32xf32>, vector<32x5xf32>, vector<6x5xf32> -> vector<6x5xf32>
    %c0_55 = arith.constant 0 : index
    %c0_56 = arith.constant 0 : index
    %91 = vector.load %arg19[%c0_55, %c0_56] : memref<6x12xf32, #tpu.memory_space<vmem>>, vector<6x12xf32>
    %c0_57 = arith.constant 0 : index
    %c0_58 = arith.constant 0 : index
    %92 = vector.load %arg15[%c0_57, %c0_58] : memref<12x5xf32, #tpu.memory_space<vmem>>, vector<12x5xf32>
    %cst_59 = arith.constant dense<0.000000e+00> : vector<6x5xf32>
    %93 = tpu.matmul %91, %92, %cst_59 {dimension_numbers = #tpu.dot_dimension_numbers<[1], [0], [0], [1], [0, 0, 1, 1], [], []>} : vector<6x12xf32>, vector<12x5xf32>, vector<6x5xf32> -> vector<6x5xf32>
    %94 = arith.addf %90, %93 : vector<6x5xf32>
    %c0_60 = arith.constant 0 : index
    %c0_61 = arith.constant 0 : index
    %95 = vector.load %arg16[%c0_60, %c0_61] : memref<1x5xf32, #tpu.memory_space<vmem>>, vector<1x5xf32>
    %96 = vector.broadcast %95 : vector<1x5xf32> to vector<6x5xf32>
    %97 = arith.addf %94, %96 : vector<6x5xf32>
    %c0_62 = arith.constant 0 : index
    %c0_63 = arith.constant 0 : index
    %98 = vector.load %arg17[%c0_62, %c0_63] : memref<6x5xf32, #tpu.memory_space<vmem>>, vector<6x5xf32>
    tpu.vector_store %arg17[%c0_62, %c0_63], %97 {strides = array<i32>} : memref<6x5xf32, #tpu.memory_space<vmem>>, vector<6x5xf32>,
    return
  }
}

</mosaic_0001>

<llo_original>
// kernel: sms_agent_forward.1
$region0: #{sms_agent_forward.1}
  #allocation0 [shape = 'u32[]', space=smem, size = 0x4, offset = 0x4, fixed_abs, tag = 'smem constant byte address 0x4 - core index']
  #allocation1 [shape = 'u32[144,128]{1,0:T(1,128)}', space=vmem, size = 0x12000, scoped, tag = 'internal scratch']
  #allocation2 [shape = 'f32[6,12]{1,0:T(8,128)}', space=vmem, size = 0x1000, scoped, tag = 'scratch operand']
  %s0 = inlined_call_operand.vmem [shape: f32[6,16], index: 0, kind: input, shape index: {}]
  %s1 = inlined_call_operand.vmem [shape: f32[6,10], index: 1, kind: input, shape index: {}]
  %s2 = inlined_call_operand.vmem [shape: f32[6,32], index: 2, kind: input, shape index: {}]
  %s3 = inlined_call_operand.vmem [shape: f32[16,32], index: 3, kind: input, shape index: {}]
  %s4 = inlined_call_operand.vmem [shape: f32[1,32], index: 4, kind: input, shape index: {}]
  %s5 = inlined_call_operand.vmem [shape: f32[32,96], index: 5, kind: input, shape index: {}]
  %s6 = inlined_call_operand.vmem [shape: f32[32,96], index: 6, kind: input, shape index: {}]
  %s7 = inlined_call_operand.vmem [shape: f32[1,96], index: 7, kind: input, shape index: {}]
  %s8 = inlined_call_operand.vmem [shape: f32[1,96], index: 8, kind: input, shape index: {}]
  %s9 = inlined_call_operand.vmem [shape: f32[10,32], index: 9, kind: input, shape index: {}]
  %s10 = inlined_call_operand.vmem [shape: f32[3,32], index: 10, kind: input, shape index: {}]
  %s11 = inlined_call_operand.vmem [shape: f32[1,32], index: 11, kind: input, shape index: {}]
  %s12 = inlined_call_operand.vmem [shape: f32[32,12], index: 12, kind: input, shape index: {}]
  %s13 = inlined_call_operand.vmem [shape: f32[1,12], index: 13, kind: input, shape index: {}]
  %s14 = inlined_call_operand.vmem [shape: f32[32,5], index: 14, kind: input, shape index: {}]
  %s15 = inlined_call_operand.vmem [shape: f32[12,5], index: 15, kind: input, shape index: {}]
  %s16 = inlined_call_operand.vmem [shape: f32[1,5], index: 16, kind: input, shape index: {}]
  %s17 = inlined_call_operand.vmem [shape: f32[6,5], index: 17, kind: output, shape index: {0}]
  %s18 = inlined_call_operand.vmem [shape: f32[6,32], index: 18, kind: output, shape index: {1}]
  %19 = xla_tuple %s17, %s18
  %s20 = sld [smem:[#allocation0]]
  $region86: #{sms_agent_forward.1} parent=0
    _
  %s22 = ssub.s32 1, %s20
  %s23 = scalar_select 0, %s22, %s20
  // Predicated region
  $region2: #{sms_agent_forward.1} parent=0 // pred_check
    _
  $region3: #{sms_agent_forward.1} parent=0 // pred_check_branch
    %25 = sbr.rel (0) target = $region5
  $region4: #{sms_agent_forward.1} parent=0 // pred_region
    _
  $region5: #{sms_agent_forward.1} parent=0 // pred_fallthru
    _
  // Predicated region
  $region6: #{sms_agent_forward.1} parent=0 // pred_check
    _
  $region7: #{sms_agent_forward.1} parent=0 // pred_check_branch
    %27 = sbr.rel (0) target = $region9
  $region8: #{sms_agent_forward.1} parent=0 // pred_region
    _
  $region9: #{sms_agent_forward.1} parent=0 // pred_fallthru
    _
  // Predicated region
  $region10: #{sms_agent_forward.1} parent=0 // pred_check
    _
  $region11: #{sms_agent_forward.1} parent=0 // pred_check_branch
    %29 = sbr.rel (0) target = $region13
  $region12: #{sms_agent_forward.1} parent=0 // pred_region
    _
  $region13: #{sms_agent_forward.1} parent=0 // pred_fallthru
    _
  // Predicated region
  $region14: #{sms_agent_forward.1} parent=0 // pred_check
    _
  $region15: #{sms_agent_forward.1} parent=0 // pred_check_branch
    %31 = sbr.rel (0) target = $region17
  $region16: #{sms_agent_forward.1} parent=0 // pred_region
    _
  $region17: #{sms_agent_forward.1} parent=0 // pred_fallthru
    _
  // Predicated region
  $region18: #{sms_agent_forward.1} parent=0 // pred_check
    _
  $region19: #{sms_agent_forward.1} parent=0 // pred_check_branch
    %33 = sbr.rel (0) target = $region21
  $region20: #{sms_agent_forward.1} parent=0 // pred_region
    _
  $region21: #{sms_agent_forward.1} parent=0 // pred_fallthru
    _
  // Predicated region
  $region22: #{sms_agent_forward.1} parent=0 // pred_check
    _
  $region23: #{sms_agent_forward.1} parent=0 // pred_check_branch
    %35 = sbr.rel (0) target = $region25
  $region24: #{sms_agent_forward.1} parent=0 // pred_region
    _
  $region25: #{sms_agent_forward.1} parent=0 // pred_fallthru
    _
  // Predicated region
  $region26: #{sms_agent_forward.1} parent=0 // pred_check
    _
  $region27: #{sms_agent_forward.1} parent=0 // pred_check_branch
    %37 = sbr.rel (0) target = $region29
  $region28: #{sms_agent_forward.1} parent=0 // pred_region
    _
  $region29: #{sms_agent_forward.1} parent=0 // pred_fallthru
    _
  // Predicated region
  $region30: #{sms_agent_forward.1} parent=0 // pred_check
    _
  $region31: #{sms_agent_forward.1} parent=0 // pred_check_branch
    %39 = sbr.rel (0) target = $region33
  $region32: #{sms_agent_forward.1} parent=0 // pred_region
    _
  $region33: #{sms_agent_forward.1} parent=0 // pred_fallthru
    _
  // Predicated region
  $region34: #{sms_agent_forward.1} parent=0 // pred_check
    _
  $region35: #{sms_agent_forward.1} parent=0 // pred_check_branch
    %41 = sbr.rel (0) target = $region37
  $region36: #{sms_agent_forward.1} parent=0 // pred_region
    _
  $region37: #{sms_agent_forward.1} parent=0 // pred_fallthru
    _
  // Predicated region
  $region38: #{sms_agent_forward.1} parent=0 // pred_check
    _
  $region39: #{sms_agent_forward.1} parent=0 // pred_check_branch
    %43 = sbr.rel (0) target = $region41
  $region40: #{sms_agent_forward.1} parent=0 // pred_region
    _
  $region41: #{sms_agent_forward.1} parent=0 // pred_fallthru
    _
  // Predicated region
  $region42: #{sms_agent_forward.1} parent=0 // pred_check
    _
  $region43: #{sms_agent_forward.1} parent=0 // pred_check_branch
    %45 = sbr.rel (0) target = $region45
  $region44: #{sms_agent_forward.1} parent=0 // pred_region
    _
  $region45: #{sms_agent_forward.1} parent=0 // pred_fallthru
    _
  // Predicated region
  $region46: #{sms_agent_forward.1} parent=0 // pred_check
    _
  $region47: #{sms_agent_forward.1} parent=0 // pred_check_branch
    %47 = sbr.rel (0) target = $region49
  $region48: #{sms_agent_forward.1} parent=0 // pred_region
    _
  $region49: #{sms_agent_forward.1} parent=0 // pred_fallthru
    _
  // Predicated region
  $region50: #{sms_agent_forward.1} parent=0 // pred_check
    _
  $region51: #{sms_agent_forward.1} parent=0 // pred_check_branch
    %49 = sbr.rel (0) target = $region53
  $region52: #{sms_agent_forward.1} parent=0 // pred_region
    _
  $region53: #{sms_agent_forward.1} parent=0 // pred_fallthru
    _
  // Predicated region
  $region54: #{sms_agent_forward.1} parent=0 // pred_check
    _
  $region55: #{sms_agent_forward.1} parent=0 // pred_check_branch
    %51 = sbr.rel (0) target = $region57
  $region56: #{sms_agent_forward.1} parent=0 // pred_region
    _
  $region57: #{sms_agent_forward.1} parent=0 // pred_fallthru
    _
  // Predicated region
  $region58: #{sms_agent_forward.1} parent=0 // pred_check
    _
  $region59: #{sms_agent_forward.1} parent=0 // pred_check_branch
    %53 = sbr.rel (0) target = $region61
  $region60: #{sms_agent_forward.1} parent=0 // pred_region
    _
  $region61: #{sms_agent_forward.1} parent=0 // pred_fallthru
    _
  // Predicated region
  $region62: #{sms_agent_forward.1} parent=0 // pred_check
    _
  $region63: #{sms_agent_forward.1} parent=0 // pred_check_branch
    %55 = sbr.rel (0) target = $region65
  $region64: #{sms_agent_forward.1} parent=0 // pred_region
    _
  $region65: #{sms_agent_forward.1} parent=0 // pred_fallthru
    _
  // Predicated region
  $region66: #{sms_agent_forward.1} parent=0 // pred_check
    _
  $region67: #{sms_agent_forward.1} parent=0 // pred_check_branch
    %57 = sbr.rel (0) target = $region69
  $region68: #{sms_agent_forward.1} parent=0 // pred_region
    _
  $region69: #{sms_agent_forward.1} parent=0 // pred_fallthru
    _
  %v58 = vld [vmem:[%s0] sm:$0x3f]
  %v59 = vld [vmem:[%s3] sm:$0xff]
  %v60 = vld [vmem:[%s3 + $0x8] sm:$0xff]
  %v61 = vld [vmem:[%s4] sm:$0x1]
  %v63 = vlaneseq
  %v64 = vshrl.u32 %v63, 7
  %v65 = vsub.s32 0, %v64
  %v66 = vrot.slane %v61, %v65
  %vm68 = vcmask 130048
  %v70 = vsel %vm68, %v58, 0
  %72 = vmatprep.subr.mxu0 0.0
  %73 = vmatpush1.msra.mxu0 %v59
  %74 = vmatprep.subr.mxu0 0.0
  %75 = vmatpush1.msra.mxu0 %v60
  %76 = vmatprep.subr.mxu0 0.0
  %77 = vmatpush1.msra.mxu0 0.0
  %78 = vmatprep.subr.mxu0 0.0
  %79 = vmatpush1.msra.mxu0 0.0
  %80 = vmatprep.subr.mxu0 0.0
  %81 = vmatpush1.msra.mxu0 0.0
  %82 = vmatprep.subr.mxu0 0.0
  %83 = vmatpush1.msra.mxu0 0.0
  %84 = vmatprep.subr.mxu0 0.0
  %85 = vmatpush1.msra.mxu0 0.0
  %86 = vmatprep.subr.mxu0 0.0
  %87 = vmatpush1.msra.mxu0 0.0
  %88 = vmatprep.subr.mxu0 0.0
  %89 = vmatpush1.msra.mxu0 0.0
  %90 = vmatprep.subr.mxu0 0.0
  %91 = vmatpush1.msra.mxu0 0.0
  %92 = vmatprep.subr.mxu0 0.0
  %93 = vmatpush1.msra.mxu0 0.0
  %94 = vmatprep.subr.mxu0 0.0
  %95 = vmatpush1.msra.mxu0 0.0
  %96 = vmatprep.subr.mxu0 0.0
  %97 = vmatpush1.msra.mxu0 0.0
  %98 = vmatprep.subr.mxu0 0.0
  %99 = vmatpush1.msra.mxu0 0.0
  %100 = vmatprep.subr.mxu0 0.0
  %101 = vmatpush1.msra.mxu0 0.0
  %102 = vmatprep.subr.mxu0 0.0
  %103 = vmatpush1.msra.mxu0 0.0
  %104 = vmatprep.subr.mxu0 0.0
  %105 = vmatpush1.msra.mxu0 0.0
  %106 = vmatprep.subr.mxu0 0.0
  %107 = vmatpush1.msra.mxu0 0.0
  %108 = vmatprep.subr.mxu0 0.0
  %109 = vmatpush1.msra.mxu0 0.0
  %110 = vmatprep.subr.mxu0 0.0
  %111 = vmatpush1.msra.mxu0 0.0
  %112 = vmatprep.subr.mxu0 0.0
  %113 = vmatpush1.msra.mxu0 0.0
  %114 = vmatprep.subr.mxu0 0.0
  %115 = vmatpush1.msra.mxu0 0.0
  %116 = vmatprep.subr.mxu0 0.0
  %117 = vmatpush1.msra.mxu0 0.0
  %118 = vmatprep.subr.mxu0 0.0
  %119 = vmatpush1.msra.mxu0 0.0
  %120 = vmatprep.subr.mxu0 0.0
  %121 = vmatpush1.msra.mxu0 0.0
  %122 = vmatprep.subr.mxu0 0.0
  %123 = vmatpush1.msra.mxu0 0.0
  %124 = vmatprep.subr.mxu0 0.0
  %125 = vmatpush1.msra.mxu0 0.0
  %126 = vmatprep.subr.mxu0 0.0
  %127 = vmatpush1.msra.mxu0 0.0
  %128 = vmatprep.subr.mxu0 0.0
  %129 = vmatpush1.msra.mxu0 0.0
  %130 = vmatprep.subr.mxu0 0.0
  %131 = vmatpush1.msra.mxu0 0.0
  %132 = vmatprep.subr.mxu0 0.0
  %133 = vmatpush1.msra.mxu0 0.0
  %134 = vmatprep.subr.mxu0 0.0
  %135 = vmatpush1.msra.mxu0 0.0
  %136 = vmatprep.mubr.f32.mxu0 0.0
  %137 = vmatmul.mubr.f32.gmra.mrb[0].mxu0 %v70
  %v138 = vpop.f32.mrb[0].mxu0
  %v139 = vadd.f32 %v66, %v138
  %v140 = vpop.f32.mrb[0].mxu0
  %141 = vdwg.mxu0
  %v142 = vmax.f32 %v139, 0.0
  %v143 = vld [vmem:[%s2] sm:$0x3f]
  %v144 = vld [vmem:[%s5] sm:$0xff]
  %v145 = vld [vmem:[%s5 + $0x8] sm:$0xff]
  %v146 = vld [vmem:[%s5 + $0x10] sm:$0xff]
  %v147 = vld [vmem:[%s5 + $0x18] sm:$0xff]
  %v148 = vld [vmem:[%s7] sm:$0x1]
  %v150 = vlaneseq
  %v151 = vshrl.u32 %v150, 7
  %v152 = vsub.s32 0, %v151
  %v153 = vrot.slane %v148, %v152
  %vm155 = vcmask 261120
  %v157 = vsel %vm155, %v142, 0
  %159 = vmatprep.subr.mxu0 0.0
  %160 = vmatpush1.msra.mxu0 %v144
  %161 = vmatprep.subr.mxu0 0.0
  %162 = vmatpush1.msra.mxu0 %v145
  %163 = vmatprep.subr.mxu0 0.0
  %164 = vmatpush1.msra.mxu0 %v146
  %165 = vmatprep.subr.mxu0 0.0
  %166 = vmatpush1.msra.mxu0 %v147
  %167 = vmatprep.subr.mxu0 0.0
  %168 = vmatpush1.msra.mxu0 0.0
  %169 = vmatprep.subr.mxu0 0.0
  %170 = vmatpush1.msra.mxu0 0.0
  %171 = vmatprep.subr.mxu0 0.0
  %172 = vmatpush1.msra.mxu0 0.0
  %173 = vmatprep.subr.mxu0 0.0
  %174 = vmatpush1.msra.mxu0 0.0
  %175 = vmatprep.subr.mxu0 0.0
  %176 = vmatpush1.msra.mxu0 0.0
  %177 = vmatprep.subr.mxu0 0.0
  %178 = vmatpush1.msra.mxu0 0.0
  %179 = vmatprep.subr.mxu0 0.0
  %180 = vmatpush1.msra.mxu0 0.0
  %181 = vmatprep.subr.mxu0 0.0
  %182 = vmatpush1.msra.mxu0 0.0
  %183 = vmatprep.subr.mxu0 0.0
  %184 = vmatpush1.msra.mxu0 0.0
  %185 = vmatprep.subr.mxu0 0.0
  %186 = vmatpush1.msra.mxu0 0.0
  %187 = vmatprep.subr.mxu0 0.0
  %188 = vmatpush1.msra.mxu0 0.0
  %189 = vmatprep.subr.mxu0 0.0
  %190 = vmatpush1.msra.mxu0 0.0
  %191 = vmatprep.subr.mxu0 0.0
  %192 = vmatpush1.msra.mxu0 0.0
  %193 = vmatprep.subr.mxu0 0.0
  %194 = vmatpush1.msra.mxu0 0.0
  %195 = vmatprep.subr.mxu0 0.0
  %196 = vmatpush1.msra.mxu0 0.0
  %197 = vmatprep.subr.mxu0 0.0
  %198 = vmatpush1.msra.mxu0 0.0
  %199 = vmatprep.subr.mxu0 0.0
  %200 = vmatpush1.msra.mxu0 0.0
  %201 = vmatprep.subr.mxu0 0.0
  %202 = vmatpush1.msra.mxu0 0.0
  %203 = vmatprep.subr.mxu0 0.0
  %204 = vmatpush1.msra.mxu0 0.0
  %205 = vmatprep.subr.mxu0 0.0
  %206 = vmatpush1.msra.mxu0 0.0
  %207 = vmatprep.subr.mxu0 0.0
  %208 = vmatpush1.msra.mxu0 0.0
  %209 = vmatprep.subr.mxu0 0.0
  %210 = vmatpush1.msra.mxu0 0.0
  %211 = vmatprep.subr.mxu0 0.0
  %212 = vmatpush1.msra.mxu0 0.0
  %213 = vmatprep.subr.mxu0 0.0
  %214 = vmatpush1.msra.mxu0 0.0
  %215 = vmatprep.subr.mxu0 0.0
  %216 = vmatpush1.msra.mxu0 0.0
  %217 = vmatprep.subr.mxu0 0.0
  %218 = vmatpush1.msra.mxu0 0.0
  %219 = vmatprep.subr.mxu0 0.0
  %220 = vmatpush1.msra.mxu0 0.0
  %221 = vmatprep.subr.mxu0 0.0
  %222 = vmatpush1.msra.mxu0 0.0
  %223 = vmatprep.mubr.f32.mxu0 0.0
  %224 = vmatmul.mubr.f32.gmra.mrb[0].mxu0 %v157
  %v225 = vpop.f32.mrb[0].mxu0
  %v226 = vadd.f32 %v153, %v225
  %v227 = vpop.f32.mrb[0].mxu0
  %228 = vdwg.mxu0
  %v229 = vld [vmem:[%s6] sm:$0xff]
  %v230 = vld [vmem:[%s6 + $0x8] sm:$0xff]
  %v231 = vld [vmem:[%s6 + $0x10] sm:$0xff]
  %v232 = vld [vmem:[%s6 + $0x18] sm:$0xff]
  %v233 = vld [vmem:[%s8] sm:$0x1]
  %v235 = vlaneseq
  %v236 = vshrl.u32 %v235, 7
  %v237 = vsub.s32 0, %v236
  %v238 = vrot.slane %v233, %v237
  %v241 = vsel %vm155, %v143, 0
  %243 = vmatprep.subr.mxu0 0.0
  %244 = vmatpush1.msra.mxu0 %v229
  %245 = vmatprep.subr.mxu0 0.0
  %246 = vmatpush1.msra.mxu0 %v230
  %247 = vmatprep.subr.mxu0 0.0
  %248 = vmatpush1.msra.mxu0 %v231
  %249 = vmatprep.subr.mxu0 0.0
  %250 = vmatpush1.msra.mxu0 %v232
  %251 = vmatprep.subr.mxu0 0.0
  %252 = vmatpush1.msra.mxu0 0.0
  %253 = vmatprep.subr.mxu0 0.0
  %254 = vmatpush1.msra.mxu0 0.0
  %255 = vmatprep.subr.mxu0 0.0
  %256 = vmatpush1.msra.mxu0 0.0
  %257 = vmatprep.subr.mxu0 0.0
  %258 = vmatpush1.msra.mxu0 0.0
  %259 = vmatprep.subr.mxu0 0.0
  %260 = vmatpush1.msra.mxu0 0.0
  %261 = vmatprep.subr.mxu0 0.0
  %262 = vmatpush1.msra.mxu0 0.0
  %263 = vmatprep.subr.mxu0 0.0
  %264 = vmatpush1.msra.mxu0 0.0
  %265 = vmatprep.subr.mxu0 0.0
  %266 = vmatpush1.msra.mxu0 0.0
  %267 = vmatprep.subr.mxu0 0.0
  %268 = vmatpush1.msra.mxu0 0.0
  %269 = vmatprep.subr.mxu0 0.0
  %270 = vmatpush1.msra.mxu0 0.0
  %271 = vmatprep.subr.mxu0 0.0
  %272 = vmatpush1.msra.mxu0 0.0
  %273 = vmatprep.subr.mxu0 0.0
  %274 = vmatpush1.msra.mxu0 0.0
  %275 = vmatprep.subr.mxu0 0.0
  %276 = vmatpush1.msra.mxu0 0.0
  %277 = vmatprep.subr.mxu0 0.0
  %278 = vmatpush1.msra.mxu0 0.0
  %279 = vmatprep.subr.mxu0 0.0
  %280 = vmatpush1.msra.mxu0 0.0
  %281 = vmatprep.subr.mxu0 0.0
  %282 = vmatpush1.msra.mxu0 0.0
  %283 = vmatprep.subr.mxu0 0.0
  %284 = vmatpush1.msra.mxu0 0.0
  %285 = vmatprep.subr.mxu0 0.0
  %286 = vmatpush1.msra.mxu0 0.0
  %287 = vmatprep.subr.mxu0 0.0
  %288 = vmatpush1.msra.mxu0 0.0
  %289 = vmatprep.subr.mxu0 0.0
  %290 = vmatpush1.msra.mxu0 0.0
  %291 = vmatprep.subr.mxu0 0.0
  %292 = vmatpush1.msra.mxu0 0.0
  %293 = vmatprep.subr.mxu0 0.0
  %294 = vmatpush1.msra.mxu0 0.0
  %295 = vmatprep.subr.mxu0 0.0
  %296 = vmatpush1.msra.mxu0 0.0
  %297 = vmatprep.subr.mxu0 0.0
  %298 = vmatpush1.msra.mxu0 0.0
  %299 = vmatprep.subr.mxu0 0.0
  %300 = vmatpush1.msra.mxu0 0.0
  %301 = vmatprep.subr.mxu0 0.0
  %302 = vmatpush1.msra.mxu0 0.0
  %303 = vmatprep.subr.mxu0 0.0
  %304 = vmatpush1.msra.mxu0 0.0
  %305 = vmatprep.subr.mxu0 0.0
  %306 = vmatpush1.msra.mxu0 0.0
  %307 = vmatprep.mubr.f32.mxu0 0.0
  %308 = vmatmul.mubr.f32.gmra.mrb[0].mxu0 %v241
  %v309 = vpop.f32.mrb[0].mxu0
  %v310 = vadd.f32 %v238, %v309
  %v311 = vpop.f32.mrb[0].mxu0
  %312 = vdwg.mxu0
  %v313 = vadd.f32 %v226, %v310
  %v314 = vxor.u32 %v313, 2147483648
  %v315 = vmul.f32 %v314, 1.442695
  %v316 = vpow.pop %v315
  %v317 = vadd.f32 %v316, 1.0
  %v318 = vrcp.pop %v317
  %v319 = vmul.f32 1.0, %v318
  %321 = vrot.lane.b32.xlu0 %v310, 64
  %v322 = vpop.permute.xlu0 %321
  %v324 = vmul.f32 %v319, %v322
  %326 = vrot.lane.b32.xlu0 %v324, 64
  %v327 = vpop.permute.xlu0 %326
  %v329 = vadd.f32 %v226, %v327
  %v330 = vtanh.pop %v329
  %v331 = vsub.f32 1.0, %v319
  %333 = vrot.lane.b32.xlu0 %v330, 96
  %v334 = vpop.permute.xlu0 %333
  %v336 = vmul.f32 %v331, %v334
  %337 = vrot.lane.b32.xlu0 %v143, 32
  %v338 = vpop.permute.xlu0 %337
  %v340 = vmul.f32 %v319, %v338
  %v341 = vadd.f32 %v336, %v340
  %343 = vrot.lane.b32.xlu0 %v341, 96
  %v344 = vpop.permute.xlu0 %343
  %vm346 = vcmask 259072
  %347 = vst.msk [vmem:[%s18] sm:$0x3f] %vm346, %v344
  %v348 = vlaneseq
  %v349 = vshrl.u32 %v348, 7
  %v350 = vlaneseq
  %v351 = vand.u32 %v350, 127
  %v352 = vmul.u32 %v351, 2
  %vm353 = vcmp.ge.s32.totalorder %v349, %v352
  %v354 = vadd.s32 %v351, 1
  %v355 = vmul.u32 %v354, 2
  %vm356 = vcmp.lt.s32.totalorder %v349, %v355
  %vm357 = vmand %vm353, %vm356
  %v358 = vsel %vm357, 1, 0
  %v359 = vcvt.s32.f32 %v358
  %v360 = vld [vmem:[%s1] sm:$0x3f]
  %v361 = vld [vmem:[%s9] sm:$0xff]
  %v362 = vld [vmem:[%s9 + $0x8] sm:$0x3]
  %v363 = vld [vmem:[%s10] sm:$0x7]
  %vm364 = vcmask 23552
  %v366 = vsel %vm364, %v359, 0
  %vm368 = vcmask 1042432
  %v370 = vsel %vm368, %v363, 0
  %372 = vmatprep.subr.mxu0 0.0
  %373 = vmatpush1.msra.mxu0 %v370
  %374 = vmatprep.subr.mxu0 0.0
  %375 = vmatpush1.msra.mxu0 0.0
  %376 = vmatprep.subr.mxu0 0.0
  %377 = vmatpush1.msra.mxu0 0.0
  %378 = vmatprep.subr.mxu0 0.0
  %379 = vmatpush1.msra.mxu0 0.0
  %380 = vmatprep.subr.mxu0 0.0
  %381 = vmatpush1.msra.mxu0 0.0
  %382 = vmatprep.subr.mxu0 0.0
  %383 = vmatpush1.msra.mxu0 0.0
  %384 = vmatprep.subr.mxu0 0.0
  %385 = vmatpush1.msra.mxu0 0.0
  %386 = vmatprep.subr.mxu0 0.0
  %387 = vmatpush1.msra.mxu0 0.0
  %388 = vmatprep.subr.mxu0 0.0
  %389 = vmatpush1.msra.mxu0 0.0
  %390 = vmatprep.subr.mxu0 0.0
  %391 = vmatpush1.msra.mxu0 0.0
  %392 = vmatprep.subr.mxu0 0.0
  %393 = vmatpush1.msra.mxu0 0.0
  %394 = vmatprep.subr.mxu0 0.0
  %395 = vmatpush1.msra.mxu0 0.0
  %396 = vmatprep.subr.mxu0 0.0
  %397 = vmatpush1.msra.mxu0 0.0
  %398 = vmatprep.subr.mxu0 0.0
  %399 = vmatpush1.msra.mxu0 0.0
  %400 = vmatprep.subr.mxu0 0.0
  %401 = vmatpush1.msra.mxu0 0.0
  %402 = vmatprep.subr.mxu0 0.0
  %403 = vmatpush1.msra.mxu0 0.0
  %404 = vmatprep.subr.mxu0 0.0
  %405 = vmatpush1.msra.mxu0 0.0
  %406 = vmatprep.subr.mxu0 0.0
  %407 = vmatpush1.msra.mxu0 0.0
  %408 = vmatprep.subr.mxu0 0.0
  %409 = vmatpush1.msra.mxu0 0.0
  %410 = vmatprep.subr.mxu0 0.0
  %411 = vmatpush1.msra.mxu0 0.0
  %412 = vmatprep.subr.mxu0 0.0
  %413 = vmatpush1.msra.mxu0 0.0
  %414 = vmatprep.subr.mxu0 0.0
  %415 = vmatpush1.msra.mxu0 0.0
  %416 = vmatprep.subr.mxu0 0.0
  %417 = vmatpush1.msra.mxu0 0.0
  %418 = vmatprep.subr.mxu0 0.0
  %419 = vmatpush1.msra.mxu0 0.0
  %420 = vmatprep.subr.mxu0 0.0
  %421 = vmatpush1.msra.mxu0 0.0
  %422 = vmatprep.subr.mxu0 0.0
  %423 = vmatpush1.msra.mxu0 0.0
  %424 = vmatprep.subr.mxu0 0.0
  %425 = vmatpush1.msra.mxu0 0.0
  %426 = vmatprep.subr.mxu0 0.0
  %427 = vmatpush1.msra.mxu0 0.0
  %428 = vmatprep.subr.mxu0 0.0
  %429 = vmatpush1.msra.mxu0 0.0
  %430 = vmatprep.subr.mxu0 0.0
  %431 = vmatpush1.msra.mxu0 0.0
  %432 = vmatprep.subr.mxu0 0.0
  %433 = vmatpush1.msra.mxu0 0.0
  %434 = vmatprep.subr.mxu0 0.0
  %435 = vmatpush1.msra.mxu0 0.0
  %436 = vmatprep.mubr.f32.mxu0 0.0
  %437 = vmatmul.mubr.f32.gmra.mrb[0].mxu0 %v366
  %v438 = vpop.f32.mrb[0].mxu0
  %v439 = vadd.f32 0.0, %v438
  %v440 = vpop.f32.mrb[0].mxu0
  %441 = vdwg.mxu0
  %vm442 = vcmask 80896
  %v444 = vsel %vm442, %v360, 0
  %vm446 = vcmask 1041408
  %v448 = vsel %vm446, %v362, 0
  %450 = vmatprep.subr.mxu0 0.0
  %451 = vmatpush1.msra.mxu0 %v361
  %452 = vmatprep.subr.mxu0 0.0
  %453 = vmatpush1.msra.mxu0 %v448
  %454 = vmatprep.subr.mxu0 0.0
  %455 = vmatpush1.msra.mxu0 0.0
  %456 = vmatprep.subr.mxu0 0.0
  %457 = vmatpush1.msra.mxu0 0.0
  %458 = vmatprep.subr.mxu0 0.0
  %459 = vmatpush1.msra.mxu0 0.0
  %460 = vmatprep.subr.mxu0 0.0
  %461 = vmatpush1.msra.mxu0 0.0
  %462 = vmatprep.subr.mxu0 0.0
  %463 = vmatpush1.msra.mxu0 0.0
  %464 = vmatprep.subr.mxu0 0.0
  %465 = vmatpush1.msra.mxu0 0.0
  %466 = vmatprep.subr.mxu0 0.0
  %467 = vmatpush1.msra.mxu0 0.0
  %468 = vmatprep.subr.mxu0 0.0
  %469 = vmatpush1.msra.mxu0 0.0
  %470 = vmatprep.subr.mxu0 0.0
  %471 = vmatpush1.msra.mxu0 0.0
  %472 = vmatprep.subr.mxu0 0.0
  %473 = vmatpush1.msra.mxu0 0.0
  %474 = vmatprep.subr.mxu0 0.0
  %475 = vmatpush1.msra.mxu0 0.0
  %476 = vmatprep.subr.mxu0 0.0
  %477 = vmatpush1.msra.mxu0 0.0
  %478 = vmatprep.subr.mxu0 0.0
  %479 = vmatpush1.msra.mxu0 0.0
  %480 = vmatprep.subr.mxu0 0.0
  %481 = vmatpush1.msra.mxu0 0.0
  %482 = vmatprep.subr.mxu0 0.0
  %483 = vmatpush1.msra.mxu0 0.0
  %484 = vmatprep.subr.mxu0 0.0
  %485 = vmatpush1.msra.mxu0 0.0
  %486 = vmatprep.subr.mxu0 0.0
  %487 = vmatpush1.msra.mxu0 0.0
  %488 = vmatprep.subr.mxu0 0.0
  %489 = vmatpush1.msra.mxu0 0.0
  %490 = vmatprep.subr.mxu0 0.0
  %491 = vmatpush1.msra.mxu0 0.0
  %492 = vmatprep.subr.mxu0 0.0
  %493 = vmatpush1.msra.mxu0 0.0
  %494 = vmatprep.subr.mxu0 0.0
  %495 = vmatpush1.msra.mxu0 0.0
  %496 = vmatprep.subr.mxu0 0.0
  %497 = vmatpush1.msra.mxu0 0.0
  %498 = vmatprep.subr.mxu0 0.0
  %499 = vmatpush1.msra.mxu0 0.0
  %500 = vmatprep.subr.mxu0 0.0
  %501 = vmatpush1.msra.mxu0 0.0
  %502 = vmatprep.subr.mxu0 0.0
  %503 = vmatpush1.msra.mxu0 0.0
  %504 = vmatprep.subr.mxu0 0.0
  %505 = vmatpush1.msra.mxu0 0.0
  %506 = vmatprep.subr.mxu0 0.0
  %507 = vmatpush1.msra.mxu0 0.0
  %508 = vmatprep.subr.mxu0 0.0
  %509 = vmatpush1.msra.mxu0 0.0
  %510 = vmatprep.subr.mxu0 0.0
  %511 = vmatpush1.msra.mxu0 0.0
  %512 = vmatprep.subr.mxu0 0.0
  %513 = vmatpush1.msra.mxu0 0.0
  %514 = vmatprep.mubr.f32.mxu0 0.0
  %515 = vmatmul.mubr.f32.gmra.mrb[0].mxu0 %v444
  %v516 = vpop.f32.mrb[0].mxu0
  %v517 = vadd.f32 %v439, %v516
  %v518 = vpop.f32.mrb[0].mxu0
  %519 = vdwg.mxu0
  %v520 = vld [vmem:[%s11] sm:$0x1]
  %v522 = vlaneseq
  %v523 = vshrl.u32 %v522, 7
  %v524 = vsub.s32 0, %v523
  %v525 = vrot.slane %v520, %v524
  %v527 = vadd.f32 %v517, %v525
  %v528 = vmax.f32 %v527, 0.0
  %v529 = vld [vmem:[%s12] sm:$0xff]
  %v530 = vld [vmem:[%s12 + $0x8] sm:$0xff]
  %v531 = vld [vmem:[%s12 + $0x10] sm:$0xff]
  %v532 = vld [vmem:[%s12 + $0x18] sm:$0xff]
  %v533 = vld [vmem:[%s13] sm:$0x1]
  %v535 = vlaneseq
  %v536 = vshrl.u32 %v535, 7
  %v537 = vsub.s32 0, %v536
  %v538 = vrot.slane %v533, %v537
  %v541 = vsel %vm155, %v528, 0
  %543 = vmatprep.subr.mxu0 0.0
  %544 = vmatpush1.msra.mxu0 %v529
  %545 = vmatprep.subr.mxu0 0.0
  %546 = vmatpush1.msra.mxu0 %v530
  %547 = vmatprep.subr.mxu0 0.0
  %548 = vmatpush1.msra.mxu0 %v531
  %549 = vmatprep.subr.mxu0 0.0
  %550 = vmatpush1.msra.mxu0 %v532
  %551 = vmatprep.subr.mxu0 0.0
  %552 = vmatpush1.msra.mxu0 0.0
  %553 = vmatprep.subr.mxu0 0.0
  %554 = vmatpush1.msra.mxu0 0.0
  %555 = vmatprep.subr.mxu0 0.0
  %556 = vmatpush1.msra.mxu0 0.0
  %557 = vmatprep.subr.mxu0 0.0
  %558 = vmatpush1.msra.mxu0 0.0
  %559 = vmatprep.subr.mxu0 0.0
  %560 = vmatpush1.msra.mxu0 0.0
  %561 = vmatprep.subr.mxu0 0.0
  %562 = vmatpush1.msra.mxu0 0.0
  %563 = vmatprep.subr.mxu0 0.0
  %564 = vmatpush1.msra.mxu0 0.0
  %565 = vmatprep.subr.mxu0 0.0
  %566 = vmatpush1.msra.mxu0 0.0
  %567 = vmatprep.subr.mxu0 0.0
  %568 = vmatpush1.msra.mxu0 0.0
  %569 = vmatprep.subr.mxu0 0.0
  %570 = vmatpush1.msra.mxu0 0.0
  %571 = vmatprep.subr.mxu0 0.0
  %572 = vmatpush1.msra.mxu0 0.0
  %573 = vmatprep.subr.mxu0 0.0
  %574 = vmatpush1.msra.mxu0 0.0
  %575 = vmatprep.subr.mxu0 0.0
  %576 = vmatpush1.msra.mxu0 0.0
  %577 = vmatprep.subr.mxu0 0.0
  %578 = vmatpush1.msra.mxu0 0.0
  %579 = vmatprep.subr.mxu0 0.0
  %580 = vmatpush1.msra.mxu0 0.0
  %581 = vmatprep.subr.mxu0 0.0
  %582 = vmatpush1.msra.mxu0 0.0
  %583 = vmatprep.subr.mxu0 0.0
  %584 = vmatpush1.msra.mxu0 0.0
  %585 = vmatprep.subr.mxu0 0.0
  %586 = vmatpush1.msra.mxu0 0.0
  %587 = vmatprep.subr.mxu0 0.0
  %588 = vmatpush1.msra.mxu0 0.0
  %589 = vmatprep.subr.mxu0 0.0
  %590 = vmatpush1.msra.mxu0 0.0
  %591 = vmatprep.subr.mxu0 0.0
  %592 = vmatpush1.msra.mxu0 0.0
  %593 = vmatprep.subr.mxu0 0.0
  %594 = vmatpush1.msra.mxu0 0.0
  %595 = vmatprep.subr.mxu0 0.0
  %596 = vmatpush1.msra.mxu0 0.0
  %597 = vmatprep.subr.mxu0 0.0
  %598 = vmatpush1.msra.mxu0 0.0
  %599 = vmatprep.subr.mxu0 0.0
  %600 = vmatpush1.msra.mxu0 0.0
  %601 = vmatprep.subr.mxu0 0.0
  %602 = vmatpush1.msra.mxu0 0.0
  %603 = vmatprep.subr.mxu0 0.0
  %604 = vmatpush1.msra.mxu0 0.0
  %605 = vmatprep.subr.mxu0 0.0
  %606 = vmatpush1.msra.mxu0 0.0
  %607 = vmatprep.mubr.f32.mxu0 0.0
  %608 = vmatmul.mubr.f32.gmra.mrb[0].mxu0 %v541
  %v609 = vpop.f32.mrb[0].mxu0
  %v610 = vadd.f32 %v538, %v609
  %v611 = vpop.f32.mrb[0].mxu0
  %612 = vdwg.mxu0
  %vm613 = vcmask 95232
  %614 = vst.msk [vmem:[#allocation2] sm:$0x3f] %vm613, 0.0
  %616 = vrot.lane.b32.xlu0 %v610, 4
  %v617 = vpop.permute.xlu0 %616
  %vm619 = vcmask 60450
  %620 = vst.msk [vmem:[#allocation2 - $0x2] sm:$0xc] %vm619, %v617
  %621 = vrot.lane.b32.xlu0 %v610, 8
  %v622 = vpop.permute.xlu0 %621
  %vm624 = vcmask 95300
  %625 = vst.msk [vmem:[#allocation2 - $0x4] sm:$0x30] %vm624, %v622
  %626 = vrot.lane.b32.xlu0 %v610, 124
  %v627 = vpop.permute.xlu0 %626
  %vm629 = vcmask 25600
  %630 = vst.msk [vmem:[#allocation2 + $0x2] sm:$0x3] %vm629, %v627
  %631 = vst.msk [vmem:[#allocation2 - $0x2] sm:$0x30] %vm624, %v617
  %632 = vrot.lane.b32.xlu0 %v610, 120
  %v633 = vpop.permute.xlu0 %632
  %635 = vst.msk [vmem:[#allocation2 + $0x4] sm:$0x3] %vm629, %v633
  %636 = vst.msk [vmem:[#allocation2 + $0x2] sm:$0xc] %vm619, %v627
  %v637 = vld [vmem:[%s14] sm:$0xff]
  %v638 = vld [vmem:[%s14 + $0x8] sm:$0xff]
  %v639 = vld [vmem:[%s14 + $0x10] sm:$0xff]
  %v640 = vld [vmem:[%s14 + $0x18] sm:$0xff]
  %v641 = vld [vmem:[#allocation2] sm:$0x3f]
  %v642 = vld [vmem:[%s15] sm:$0xff]
  %v643 = vld [vmem:[%s15 + $0x8] sm:$0xf]
  %vm644 = vcmask 97280
  %v646 = vsel %vm644, %v641, 0
  %vm648 = vcmask 1043456
  %v650 = vsel %vm648, %v643, 0
  %652 = vmatprep.subr.mxu0 0.0
  %653 = vmatpush1.msra.mxu0 %v642
  %654 = vmatprep.subr.mxu0 0.0
  %655 = vmatpush1.msra.mxu0 %v650
  %656 = vmatprep.subr.mxu0 0.0
  %657 = vmatpush1.msra.mxu0 0.0
  %658 = vmatprep.subr.mxu0 0.0
  %659 = vmatpush1.msra.mxu0 0.0
  %660 = vmatprep.subr.mxu0 0.0
  %661 = vmatpush1.msra.mxu0 0.0
  %662 = vmatprep.subr.mxu0 0.0
  %663 = vmatpush1.msra.mxu0 0.0
  %664 = vmatprep.subr.mxu0 0.0
  %665 = vmatpush1.msra.mxu0 0.0
  %666 = vmatprep.subr.mxu0 0.0
  %667 = vmatpush1.msra.mxu0 0.0
  %668 = vmatprep.subr.mxu0 0.0
  %669 = vmatpush1.msra.mxu0 0.0
  %670 = vmatprep.subr.mxu0 0.0
  %671 = vmatpush1.msra.mxu0 0.0
  %672 = vmatprep.subr.mxu0 0.0
  %673 = vmatpush1.msra.mxu0 0.0
  %674 = vmatprep.subr.mxu0 0.0
  %675 = vmatpush1.msra.mxu0 0.0
  %676 = vmatprep.subr.mxu0 0.0
  %677 = vmatpush1.msra.mxu0 0.0
  %678 = vmatprep.subr.mxu0 0.0
  %679 = vmatpush1.msra.mxu0 0.0
  %680 = vmatprep.subr.mxu0 0.0
  %681 = vmatpush1.msra.mxu0 0.0
  %682 = vmatprep.subr.mxu0 0.0
  %683 = vmatpush1.msra.mxu0 0.0
  %684 = vmatprep.subr.mxu0 0.0
  %685 = vmatpush1.msra.mxu0 0.0
  %686 = vmatprep.subr.mxu0 0.0
  %687 = vmatpush1.msra.mxu0 0.0
  %688 = vmatprep.subr.mxu0 0.0
  %689 = vmatpush1.msra.mxu0 0.0
  %690 = vmatprep.subr.mxu0 0.0
  %691 = vmatpush1.msra.mxu0 0.0
  %692 = vmatprep.subr.mxu0 0.0
  %693 = vmatpush1.msra.mxu0 0.0
  %694 = vmatprep.subr.mxu0 0.0
  %695 = vmatpush1.msra.mxu0 0.0
  %696 = vmatprep.subr.mxu0 0.0
  %697 = vmatpush1.msra.mxu0 0.0
  %698 = vmatprep.subr.mxu0 0.0
  %699 = vmatpush1.msra.mxu0 0.0
  %700 = vmatprep.subr.mxu0 0.0
  %701 = vmatpush1.msra.mxu0 0.0
  %702 = vmatprep.subr.mxu0 0.0
  %703 = vmatpush1.msra.mxu0 0.0
  %704 = vmatprep.subr.mxu0 0.0
  %705 = vmatpush1.msra.mxu0 0.0
  %706 = vmatprep.subr.mxu0 0.0
  %707 = vmatpush1.msra.mxu0 0.0
  %708 = vmatprep.subr.mxu0 0.0
  %709 = vmatpush1.msra.mxu0 0.0
  %710 = vmatprep.subr.mxu0 0.0
  %711 = vmatpush1.msra.mxu0 0.0
  %712 = vmatprep.subr.mxu0 0.0
  %713 = vmatpush1.msra.mxu0 0.0
  %714 = vmatprep.subr.mxu0 0.0
  %715 = vmatpush1.msra.mxu0 0.0
  %716 = vmatprep.mubr.f32.mxu0 0.0
  %717 = vmatmul.mubr.f32.gmra.mrb[0].mxu0 %v646
  %v718 = vpop.f32.mrb[0].mxu0
  %v719 = vadd.f32 0.0, %v718
  %v720 = vpop.f32.mrb[0].mxu0
  %721 = vdwg.mxu0
  %v722 = vsel %vm155, %v344, 0
  %724 = vmatprep.subr.mxu0 0.0
  %725 = vmatpush1.msra.mxu0 %v637
  %726 = vmatprep.subr.mxu0 0.0
  %727 = vmatpush1.msra.mxu0 %v638
  %728 = vmatprep.subr.mxu0 0.0
  %729 = vmatpush1.msra.mxu0 %v639
  %730 = vmatprep.subr.mxu0 0.0
  %731 = vmatpush1.msra.mxu0 %v640
  %732 = vmatprep.subr.mxu0 0.0
  %733 = vmatpush1.msra.mxu0 0.0
  %734 = vmatprep.subr.mxu0 0.0
  %735 = vmatpush1.msra.mxu0 0.0
  %736 = vmatprep.subr.mxu0 0.0
  %737 = vmatpush1.msra.mxu0 0.0
  %738 = vmatprep.subr.mxu0 0.0
  %739 = vmatpush1.msra.mxu0 0.0
  %740 = vmatprep.subr.mxu0 0.0
  %741 = vmatpush1.msra.mxu0 0.0
  %742 = vmatprep.subr.mxu0 0.0
  %743 = vmatpush1.msra.mxu0 0.0
  %744 = vmatprep.subr.mxu0 0.0
  %745 = vmatpush1.msra.mxu0 0.0
  %746 = vmatprep.subr.mxu0 0.0
  %747 = vmatpush1.msra.mxu0 0.0
  %748 = vmatprep.subr.mxu0 0.0
  %749 = vmatpush1.msra.mxu0 0.0
  %750 = vmatprep.subr.mxu0 0.0
  %751 = vmatpush1.msra.mxu0 0.0
  %752 = vmatprep.subr.mxu0 0.0
  %753 = vmatpush1.msra.mxu0 0.0
  %754 = vmatprep.subr.mxu0 0.0
  %755 = vmatpush1.msra.mxu0 0.0
  %756 = vmatprep.subr.mxu0 0.0
  %757 = vmatpush1.msra.mxu0 0.0
  %758 = vmatprep.subr.mxu0 0.0
  %759 = vmatpush1.msra.mxu0 0.0
  %760 = vmatprep.subr.mxu0 0.0
  %761 = vmatpush1.msra.mxu0 0.0
  %762 = vmatprep.subr.mxu0 0.0
  %763 = vmatpush1.msra.mxu0 0.0
  %764 = vmatprep.subr.mxu0 0.0
  %765 = vmatpush1.msra.mxu0 0.0
  %766 = vmatprep.subr.mxu0 0.0
  %767 = vmatpush1.msra.mxu0 0.0
  %768 = vmatprep.subr.mxu0 0.0
  %769 = vmatpush1.msra.mxu0 0.0
  %770 = vmatprep.subr.mxu0 0.0
  %771 = vmatpush1.msra.mxu0 0.0
  %772 = vmatprep.subr.mxu0 0.0
  %773 = vmatpush1.msra.mxu0 0.0
  %774 = vmatprep.subr.mxu0 0.0
  %775 = vmatpush1.msra.mxu0 0.0
  %776 = vmatprep.subr.mxu0 0.0
  %777 = vmatpush1.msra.mxu0 0.0
  %778 = vmatprep.subr.mxu0 0.0
  %779 = vmatpush1.msra.mxu0 0.0
  %780 = vmatprep.subr.mxu0 0.0
  %781 = vmatpush1.msra.mxu0 0.0
  %782 = vmatprep.subr.mxu0 0.0
  %783 = vmatpush1.msra.mxu0 0.0
  %784 = vmatprep.subr.mxu0 0.0
  %785 = vmatpush1.msra.mxu0 0.0
  %786 = vmatprep.subr.mxu0 0.0
  %787 = vmatpush1.msra.mxu0 0.0
  %788 = vmatprep.mubr.f32.mxu0 0.0
  %789 = vmatmul.mubr.f32.gmra.mrb[0].mxu0 %v722
  %v790 = vpop.f32.mrb[0].mxu0
  %v791 = vadd.f32 %v719, %v790
  %v792 = vpop.f32.mrb[0].mxu0
  %793 = vdwg.mxu0
  %v794 = vld [vmem:[%s16] sm:$0x1]
  %v796 = vlaneseq
  %v797 = vshrl.u32 %v796, 7
  %v798 = vsub.s32 0, %v797
  %v799 = vrot.slane %v794, %v798
  %v801 = vadd.f32 %v791, %v799
  %vm802 = vcmask 37888
  %803 = vst.msk [vmem:[%s17] sm:$0x3f] %vm802, %v801
  // Predicated region
  $region70: #{sms_agent_forward.1} parent=0 // pred_check
    _
  $region71: #{sms_agent_forward.1} parent=0 // pred_check_branch
    %805 = sbr.rel (0) target = $region73
  $region72: #{sms_agent_forward.1} parent=0 // pred_region
    _
  $region73: #{sms_agent_forward.1} parent=0 // pred_fallthru
    _
  // Predicated region
  $region74: #{sms_agent_forward.1} parent=0 // pred_check
    _
  $region75: #{sms_agent_forward.1} parent=0 // pred_check_branch
    %807 = sbr.rel (0) target = $region77
  $region76: #{sms_agent_forward.1} parent=0 // pred_region
    _
  $region77: #{sms_agent_forward.1} parent=0 // pred_fallthru
    _
  // Predicated region
  $region78: #{sms_agent_forward.1} parent=0 // pred_check
    _
  $region79: #{sms_agent_forward.1} parent=0 // pred_check_branch
    %809 = sbr.rel (0) target = $region81
  $region80: #{sms_agent_forward.1} parent=0 // pred_region
    _
  $region81: #{sms_agent_forward.1} parent=0 // pred_fallthru
    _
  // Predicated region
  $region82: #{sms_agent_forward.1} parent=0 // pred_check
    _
  $region83: #{sms_agent_forward.1} parent=0 // pred_check_branch
    %811 = sbr.rel (0) target = $region85
  $region84: #{sms_agent_forward.1} parent=0 // pred_region
    _
  $region85: #{sms_agent_forward.1} parent=0 // pred_fallthru
    _

</llo_original>
